<compile_context>
chip_gen: v5e
topology: v5e:2x2
jax: 0.10.0
libtpu: 0.0.40
codegen_flags: <defaults>
</compile_context>

<pallas_src>
import jax
import jax.numpy as jnp
from jax.experimental import pallas as pl
from jax.experimental.pallas import tpu as pltpu


def _aan_kernel(tril_ref, inv_ref, x_ref, wx_ref, wa_ref, b_ref,
                gate_ref, avg_ref, carry_ref):
    q = pl.program_id(1)

    # Reset the running row-sum at the start of every batch element (q is the
    # innermost, sequential axis, so this is correct even when the batch axis
    # is megacore-sharded).
    @pl.when(q == 0)
    def _():
        carry_ref[...] = jnp.zeros_like(carry_ref)

    x = x_ref[0]                                     # (tq, D)
    x_f32 = x.astype(jnp.float32)
    x_mm = x.astype(tril_ref.dtype)                  # single cast for the MXU

    # Within-tile causal prefix sums on the MXU: tril(tq, tq) @ x_tile.
    local = jnp.dot(tril_ref[...], x_mm, preferred_element_type=jnp.float32)
    # Add the running row-sum carried from previous q-tiles and scale by the
    # precomputed 1/(global_row + 1) column (no per-element divide in-kernel).
    sums = local + carry_ref[...]                    # (tq, D) + (1, D)
    avg = sums * inv_ref[...]                        # (tq, D) * (tq, 1)

    # New running total == last row of `sums`; the MXU already computed it so
    # no extra XLU/VPU cross-sublane reduction is needed.
    tq = sums.shape[0]
    carry_ref[...] = sums[tq - 1:tq, :]

    # Gating Linear(2D -> 2D) as two fused (D, 2D) dots (no concat, fewer MXU
    # weight pushes); split the (tq, 2D) result at the D boundary.
    avg_mm = avg.astype(wx_ref.dtype)
    g = (jnp.dot(x_mm, wx_ref[...], preferred_element_type=jnp.float32)
         + jnp.dot(avg_mm, wa_ref[...], preferred_element_type=jnp.float32)
         + b_ref[...])
    D = x.shape[-1]
    ig = g[:, :D]
    fg = g[:, D:]

    gated = jax.nn.sigmoid(ig) * x_f32 + jax.nn.sigmoid(fg) * avg
    gate_ref[0] = gated.astype(gate_ref.dtype)
    avg_ref[0] = avg.astype(avg_ref.dtype)


def prepare_gating_params(gating_weight, gating_bias, matmul_dtype=jnp.bfloat16):
    """Convert the PyTorch-layout nn.Linear(2D, 2D) weight (out, in) into two
    (D, 2D) blocks in `x @ W` orientation (columns already ordered [ig | fg]).
    Call ONCE, outside the hot path.  bf16 operands are the MXU-native default;
    pass matmul_dtype=jnp.float32 if exact-f32 matmuls are required."""
    two_d = gating_weight.shape[0]
    D = two_d // 2
    wt = jnp.asarray(gating_weight).T                # (in=2D, out=2D)
    w_x = wt[:D, :].astype(matmul_dtype)             # x   -> [ig | fg]
    w_a = wt[D:, :].astype(matmul_dtype)             # avg -> [ig | fg]
    b = jnp.asarray(gating_bias).reshape(1, two_d).astype(jnp.float32)
    return w_x, w_a, b


def _vmem_budget_bytes():
    try:
        info = pltpu.get_tpu_info()
        cap = getattr(info, "vmem_capacity_bytes", None)
        if cap:
            return int(cap)
    except Exception:
        pass
    return 64 * 1024 * 1024  # conservative (v7x per-TC)


def _const_spec(shape):
    """BlockSpec for an operand whose block is identical at every grid step:
    single-buffered (it is only fetched once, so a second buffer is waste)."""
    idx = lambda b, q: (0,) * len(shape)
    try:
        return pl.BlockSpec(shape, idx, pipeline_mode=pl.Buffered(1))
    except TypeError:  # fallback if pipeline_mode is unavailable
        return pl.BlockSpec(shape, idx)


def average_attention(inputs, gating_params, *, tq=None, vmem_limit_bytes=None):
    """inputs: (B, L, D); gating_params from prepare_gating_params().
    Returns (gating_outputs, average_outputs), each (B, L, D)."""
    B, L, D = inputs.shape
    w_x, w_a, b = gating_params
    assert w_x.shape == (D, 2 * D) and w_a.shape == (D, 2 * D)
    matmul_dtype = w_x.dtype

    budget = _vmem_budget_bytes()
    if tq is None:
        if L <= 256:
            tq = L                               # single q tile
        elif D >= 2048:
            tq = 128                             # keep temporaries small
        elif budget >= 96 * 1024 * 1024:
            tq = 512                             # v5e/v6e: 128 MiB physical VMEM
        else:
            tq = 256                             # v7x: 64 MiB per TC
    L_pad = ((L + tq - 1) // tq) * tq
    nq = L_pad // tq

    x = inputs
    if L_pad != L:
        # Zero-pad the INPUT only: padded rows come after real rows so they
        # cannot affect the causal cumulative average, and explicit zeros avoid
        # 0*NaN from unspecified partial-block padding.
        x = jnp.pad(inputs, ((0, 0), (0, L_pad - L), (0, 0)))

    # Constant mask pieces (tiny), built once per call.
    tril = jnp.tril(jnp.ones((tq, tq), jnp.float32)).astype(matmul_dtype)
    inv_row = (1.0 / jnp.arange(1, L_pad + 1, dtype=jnp.float32)).reshape(L_pad, 1)

    out_dtype = inputs.dtype
    # Outputs are declared UNPADDED; the last partial tile's writes are masked,
    # so no post-call slicing HBM passes are needed.
    out_shapes = (
        jax.ShapeDtypeStruct((B, L, D), out_dtype),
        jax.ShapeDtypeStruct((B, L, D), out_dtype),
    )

    # --- generation-aware VMEM limit ---
    in_b = jnp.dtype(inputs.dtype).itemsize
    w_b = jnp.dtype(matmul_dtype).itemsize
    out_b = jnp.dtype(out_dtype).itemsize
    est = (
        2 * tq * D * in_b                  # x tile (double-buffered)
        + 2 * 2 * tq * D * out_b           # gate + avg tiles (double-buffered)
        + 2 * D * (2 * D) * w_b            # w_x + w_a (single-buffered)
        + tq * tq * w_b                    # tril (single-buffered)
        + 2 * tq * 4                       # inv column (double-buffered)
        + 2 * D * 4                        # bias (single-buffered)
        + D * 4                            # carry scratch
        + 12 * tq * D * 4                  # compiler temporaries (local/sums/avg/g/gates)
    )
    if vmem_limit_bytes is None:
        vmem_limit_bytes = max(32 * 1024 * 1024,
                               min(int(est * 1.5), int(budget * 3 // 4)))

    cost = pl.CostEstimate(
        flops=int(2 * B * L_pad * D * (tq + 4 * D)),
        transcendentals=int(2 * B * L_pad * D),
        bytes_accessed=int(B * L_pad * D * in_b + 2 * B * L * D * out_b
                           + 2 * D * (2 * D) * w_b + tq * tq * w_b
                           + L_pad * 4 + 2 * D * 4),
    )

    grid_spec = pltpu.PrefetchScalarGridSpec(
        num_scalar_prefetch=0,
        grid=(B, nq),
        in_specs=[
            _const_spec((tq, tq)),                               # tril mask
            pl.BlockSpec((tq, 1), lambda bi, qi: (qi, 0)),       # 1/(row+1)
            pl.BlockSpec((1, tq, D), lambda bi, qi: (bi, qi, 0)),  # x tile
            _const_spec((D, 2 * D)),                             # W[x   -> ig|fg]
            _const_spec((D, 2 * D)),                             # W[avg -> ig|fg]
            _const_spec((1, 2 * D)),                             # bias
        ],
        out_specs=[
            pl.BlockSpec((1, tq, D), lambda bi, qi: (bi, qi, 0)),
            pl.BlockSpec((1, tq, D), lambda bi, qi: (bi, qi, 0)),
        ],
        scratch_shapes=[pltpu.VMEM((1, D), jnp.float32)],        # running row sum
    )

    gate, avg = pl.pallas_call(
        _aan_kernel,
        out_shape=out_shapes,
        grid_spec=grid_spec,
        compiler_params=pltpu.CompilerParams(
            # batch tiles may be split across TensorCores; the q axis carries
            # the running sum so it must stay sequential.
            # NOTE(v7x): both TensorCores only get work if B >= 2.
            dimension_semantics=("parallel", "arbitrary"),
            vmem_limit_bytes=int(vmem_limit_bytes),
        ),
        cost_estimate=cost,
    )(tril, inv_row, x, w_x, w_a, b)
    return gate, avg

    # TODO(synk): aan_use_ffn=True (PositionwiseFeedForward on average_outputs)
    # is not implemented (module default is aan_use_ffn=False).
    # TODO(synk): the layer_cache/step incremental-decoding path is a different
    # (recurrent, single-step) computation and is not implemented here.


def _reference(inputs, gating_weight, gating_bias):
    """Pure-JAX reference mirroring the PyTorch module (f32 everywhere)."""
    B, L, D = inputs.shape
    tri = jnp.tril(jnp.ones((L, L), jnp.float32))
    weights = 1.0 / jnp.arange(1, L + 1, dtype=jnp.float32)
    mask = tri * weights[:, None]
    avg = jnp.einsum("qk,bkd->bqd", mask, inputs)
    cat = jnp.concatenate([inputs, avg], axis=-1)
    g = cat @ gating_weight.T + gating_bias
    ig, fg = g[..., :D], g[..., D:]
    gated = jax.nn.sigmoid(ig) * inputs + jax.nn.sigmoid(fg) * avg
    return gated, avg


if __name__ == "__main__":
    def make_case(key, B, L, D):
        k_x, k_w, k_b = jax.random.split(key, 3)
        x = jax.random.normal(k_x, (B, L, D), jnp.float32)
        bound = 1.0 / (2 * D) ** 0.5            # nn.Linear default init range
        w = jax.random.uniform(k_w, (2 * D, 2 * D), jnp.float32, -bound, bound)
        b = jax.random.uniform(k_b, (2 * D,), jnp.float32, -bound, bound)
        return x, w, b

    # Case 1: small module-consistent shape (batch=2, seq=8, model_dim=32), f32.
    x1, w1, b1 = make_case(jax.random.PRNGKey(0), 2, 8, 32)
    p1 = prepare_gating_params(w1, b1, jnp.float32)
    g1, a1 = average_attention(x1, p1)
    g1, a1 = jax.block_until_ready(g1), jax.block_until_ready(a1)
    rg1, ra1 = _reference(x1, w1, b1)
    assert jnp.allclose(a1, ra1, atol=1e-4, rtol=1e-4)
    assert jnp.allclose(g1, rg1, atol=1e-4, rtol=1e-4)

    # Case 2: L=32 with tq=8 to exercise the running-sum carry across q-tiles.
    x2, w2, b2 = make_case(jax.random.PRNGKey(0), 2, 32, 32)
    p2 = prepare_gating_params(w2, b2, jnp.float32)
    g2, a2 = average_attention(x2, p2, tq=8)
    g2, a2 = jax.block_until_ready(g2), jax.block_until_ready(a2)
    rg2, ra2 = _reference(x2, w2, b2)
    assert jnp.allclose(a2, ra2, atol=1e-4, rtol=1e-4)
    assert jnp.allclose(g2, rg2, atol=1e-4, rtol=1e-4)

    # Case 3: L=30 with tq=8 -> padded input, UNPADDED (masked) output tile.
    x3, w3, b3 = make_case(jax.random.PRNGKey(0), 2, 30, 32)
    p3 = prepare_gating_params(w3, b3, jnp.float32)
    g3, a3 = average_attention(x3, p3, tq=8)
    g3, a3 = jax.block_until_ready(g3), jax.block_until_ready(a3)
    rg3, ra3 = _reference(x3, w3, b3)
    assert jnp.allclose(a3, ra3, atol=1e-4, rtol=1e-4)
    assert jnp.allclose(g3, rg3, atol=1e-4, rtol=1e-4)

    # Case 4: default bf16 MXU operands (f32 accumulation/carry), looser
    # tolerance for bf16 rounding; carry now reflects the bf16-rounded matmul.
    p4 = prepare_gating_params(w2, b2)              # default bf16
    g4, a4 = average_attention(x2, p4, tq=8)
    g4, a4 = jax.block_until_ready(g4), jax.block_until_ready(a4)
    assert jnp.allclose(a4, ra2, atol=3e-2, rtol=3e-2)
    assert jnp.allclose(g4, rg2, atol=3e-2, rtol=3e-2)

    print("KERNEL_OK")
</pallas_src>

<mosaic_0001>
module attributes {stable_mosaic.version = 11 : i64} {
  func.func @_aan_kernel(%arg0: i32, %arg1: i32, %arg2: memref<8x8xf32, #tpu.memory_space<vmem>>, %arg3: memref<8x1xf32, #tpu.memory_space<vmem>>, %arg4: memref<1x8x32xf32, #tpu.memory_space<vmem>>, %arg5: memref<32x64xf32, #tpu.memory_space<vmem>>, %arg6: memref<32x64xf32, #tpu.memory_space<vmem>>, %arg7: memref<1x64xf32, #tpu.memory_space<vmem>>, %arg8: memref<1x8x32xf32, #tpu.memory_space<vmem>>, %arg9: memref<1x8x32xf32, #tpu.memory_space<vmem>>, %arg10: memref<1x32xf32, #tpu.memory_space<vmem>>) attributes {dimension_semantics = [#tpu.dimension_semantics<parallel>, #tpu.dimension_semantics<arbitrary>], iteration_bounds = array<i64: 2, 1>, scalar_prefetch = 0 : i64, scratch_operands = 1 : i64, tpu.core_type = #tpu.core_type<tc>, window_params = [{pipeline_mode = #tpu.pipeline_mode<synchronous>, transform_indices = @transform_0, window_bounds = array<i64: 8, 8>}, {transform_indices = @transform_1, window_bounds = array<i64: 8, 1>}, {transform_indices = @transform_2, window_bounds = array<i64: 1, 8, 32>}, {pipeline_mode = #tpu.pipeline_mode<synchronous>, transform_indices = @transform_3, window_bounds = array<i64: 32, 64>}, {pipeline_mode = #tpu.pipeline_mode<synchronous>, transform_indices = @transform_4, window_bounds = array<i64: 32, 64>}, {pipeline_mode = #tpu.pipeline_mode<synchronous>, transform_indices = @transform_5, window_bounds = array<i64: 1, 64>}, {transform_indices = @transform_6, window_bounds = array<i64: 1, 8, 32>}, {transform_indices = @transform_7, window_bounds = array<i64: 1, 8, 32>}]} {
    %c0_i32 = arith.constant 0 : i32
    %0 = arith.cmpi eq, %arg1, %c0_i32 : i32
    %1 = arith.extui %0 : i1 to i32
    %c0_i32_0 = arith.constant 0 : i32
    %2 = arith.cmpi ne, %1, %c0_i32_0 : i32
    scf.if %2 {
      %cst_27 = arith.constant 0.000000e+00 : f32
      %44 = vector.broadcast %cst_27 : f32 to vector<1x32xf32>
      %c0_28 = arith.constant 0 : index
      %c0_29 = arith.constant 0 : index
      %45 = vector.load %arg10[%c0_28, %c0_29] : memref<1x32xf32, #tpu.memory_space<vmem>>, vector<1x32xf32>
      tpu.vector_store %arg10[%c0_28, %c0_29], %44 {strides = array<i32>} : memref<1x32xf32, #tpu.memory_space<vmem>>, vector<1x32xf32>,
    } else {
    }
    %c0 = arith.constant 0 : index
    %c0_1 = arith.constant 0 : index
    %c0_2 = arith.constant 0 : index
    %3 = vector.load %arg4[%c0, %c0_1, %c0_2] : memref<1x8x32xf32, #tpu.memory_space<vmem>>, vector<1x8x32xf32>
    %4 = vector.shape_cast %3 : vector<1x8x32xf32> to vector<8x32xf32>
    %c0_3 = arith.constant 0 : index
    %c0_4 = arith.constant 0 : index
    %5 = vector.load %arg2[%c0_3, %c0_4] : memref<8x8xf32, #tpu.memory_space<vmem>>, vector<8x8xf32>
    %cst = arith.constant dense<0.000000e+00> : vector<8x32xf32>
    %6 = tpu.matmul %5, %4, %cst {dimension_numbers = #tpu.dot_dimension_numbers<[1], [0], [0], [1], [0, 0, 1, 1], [], []>} : vector<8x8xf32>, vector<8x32xf32>, vector<8x32xf32> -> vector<8x32xf32>
    %c0_5 = arith.constant 0 : index
    %c0_6 = arith.constant 0 : index
    %7 = vector.load %arg10[%c0_5, %c0_6] : memref<1x32xf32, #tpu.memory_space<vmem>>, vector<1x32xf32>
    %8 = vector.broadcast %7 : vector<1x32xf32> to vector<8x32xf32>
    %9 = arith.addf %6, %8 : vector<8x32xf32>
    %c0_7 = arith.constant 0 : index
    %c0_8 = arith.constant 0 : index
    %10 = vector.load %arg3[%c0_7, %c0_8] : memref<8x1xf32, #tpu.memory_space<vmem>>, vector<8x1xf32>
    %11 = vector.broadcast %10 : vector<8x1xf32> to vector<8x32xf32>
    %12 = arith.mulf %9, %11 : vector<8x32xf32>
    %13 = vector.extract_strided_slice %9 {offsets = [7, 0], sizes = [1, 32], strides = [1, 1]} : vector<8x32xf32> to vector<1x32xf32>
    %c0_9 = arith.constant 0 : index
    %c0_10 = arith.constant 0 : index
    %14 = vector.load %arg10[%c0_9, %c0_10] : memref<1x32xf32, #tpu.memory_space<vmem>>, vector<1x32xf32>
    tpu.vector_store %arg10[%c0_9, %c0_10], %13 {strides = array<i32>} : memref<1x32xf32, #tpu.memory_space<vmem>>, vector<1x32xf32>,
    %c0_11 = arith.constant 0 : index
    %c0_12 = arith.constant 0 : index
    %15 = vector.load %arg5[%c0_11, %c0_12] : memref<32x64xf32, #tpu.memory_space<vmem>>, vector<32x64xf32>
    %cst_13 = arith.constant dense<0.000000e+00> : vector<8x64xf32>
    %16 = tpu.matmul %4, %15, %cst_13 {dimension_numbers = #tpu.dot_dimension_numbers<[1], [0], [0], [1], [0, 0, 1, 1], [], []>} : vector<8x32xf32>, vector<32x64xf32>, vector<8x64xf32> -> vector<8x64xf32>
    %c0_14 = arith.constant 0 : index
    %c0_15 = arith.constant 0 : index
    %17 = vector.load %arg6[%c0_14, %c0_15] : memref<32x64xf32, #tpu.memory_space<vmem>>, vector<32x64xf32>
    %cst_16 = arith.constant dense<0.000000e+00> : vector<8x64xf32>
    %18 = tpu.matmul %12, %17, %cst_16 {dimension_numbers = #tpu.dot_dimension_numbers<[1], [0], [0], [1], [0, 0, 1, 1], [], []>} : vector<8x32xf32>, vector<32x64xf32>, vector<8x64xf32> -> vector<8x64xf32>
    %19 = arith.addf %16, %18 : vector<8x64xf32>
    %c0_17 = arith.constant 0 : index
    %c0_18 = arith.constant 0 : index
    %20 = vector.load %arg7[%c0_17, %c0_18] : memref<1x64xf32, #tpu.memory_space<vmem>>, vector<1x64xf32>
    %21 = vector.broadcast %20 : vector<1x64xf32> to vector<8x64xf32>
    %22 = arith.addf %19, %21 : vector<8x64xf32>
    %23 = vector.extract_strided_slice %22 {offsets = [0, 0], sizes = [8, 32], strides = [1, 1]} : vector<8x64xf32> to vector<8x32xf32>
    %24 = vector.extract_strided_slice %22 {offsets = [0, 32], sizes = [8, 32], strides = [1, 1]} : vector<8x64xf32> to vector<8x32xf32>
    %25 = arith.negf %23 : vector<8x32xf32>
    %26 = math.exp %25 : vector<8x32xf32>
    %cst_19 = arith.constant 1.000000e+00 : f32
    %27 = vector.broadcast %cst_19 : f32 to vector<8x32xf32>
    %28 = arith.addf %27, %26 : vector<8x32xf32>
    %29 = arith.divf %27, %28 : vector<8x32xf32>
    %30 = arith.mulf %29, %4 : vector<8x32xf32>
    %31 = arith.negf %24 : vector<8x32xf32>
    %32 = math.exp %31 : vector<8x32xf32>
    %cst_20 = arith.constant 1.000000e+00 : f32
    %33 = vector.broadcast %cst_20 : f32 to vector<8x32xf32>
    %34 = arith.addf %33, %32 : vector<8x32xf32>
    %35 = arith.divf %33, %34 : vector<8x32xf32>
    %36 = arith.mulf %35, %12 : vector<8x32xf32>
    %37 = arith.addf %30, %36 : vector<8x32xf32>
    %c0_21 = arith.constant 0 : index
    %c0_22 = arith.constant 0 : index
    %c0_23 = arith.constant 0 : index
    %38 = vector.load %arg8[%c0_21, %c0_22, %c0_23] : memref<1x8x32xf32, #tpu.memory_space<vmem>>, vector<1x8x32xf32>
    %39 = vector.shape_cast %38 : vector<1x8x32xf32> to vector<8x32xf32>
    %40 = vector.shape_cast %37 : vector<8x32xf32> to vector<1x8x32xf32>
    tpu.vector_store %arg8[%c0_21, %c0_22, %c0_23], %40 {strides = array<i32>} : memref<1x8x32xf32, #tpu.memory_space<vmem>>, vector<1x8x32xf32>,
    %c0_24 = arith.constant 0 : index
    %c0_25 = arith.constant 0 : index
    %c0_26 = arith.constant 0 : index
    %41 = vector.load %arg9[%c0_24, %c0_25, %c0_26] : memref<1x8x32xf32, #tpu.memory_space<vmem>>, vector<1x8x32xf32>
    %42 = vector.shape_cast %41 : vector<1x8x32xf32> to vector<8x32xf32>
    %43 = vector.shape_cast %12 : vector<8x32xf32> to vector<1x8x32xf32>
    tpu.vector_store %arg9[%c0_24, %c0_25, %c0_26], %43 {strides = array<i32>} : memref<1x8x32xf32, #tpu.memory_space<vmem>>, vector<1x8x32xf32>,
    return
  }
  func.func @transform_0(%arg0: i32, %arg1: i32) -> (i32, i32) {
    %c0_i32 = arith.constant 0 : i32
    %c0_i32_0 = arith.constant 0 : i32
    %c0_i32_1 = arith.constant 0 : i32
    return %c0_i32, %c0_i32_0 : i32, i32
  }
  func.func @transform_1(%arg0: i32, %arg1: i32) -> (i32, i32) {
    %c0_i32 = arith.constant 0 : i32
    %c0_i32_0 = arith.constant 0 : i32
    return %arg1, %c0_i32 : i32, i32
  }
  func.func @transform_2(%arg0: i32, %arg1: i32) -> (i32, i32, i32) {
    %c0_i32 = arith.constant 0 : i32
    %c0_i32_0 = arith.constant 0 : i32
    return %arg0, %arg1, %c0_i32 : i32, i32, i32
  }
  func.func @transform_3(%arg0: i32, %arg1: i32) -> (i32, i32) {
    %c0_i32 = arith.constant 0 : i32
    %c0_i32_0 = arith.constant 0 : i32
    %c0_i32_1 = arith.constant 0 : i32
    return %c0_i32, %c0_i32_0 : i32, i32
  }
  func.func @transform_4(%arg0: i32, %arg1: i32) -> (i32, i32) {
    %c0_i32 = arith.constant 0 : i32
    %c0_i32_0 = arith.constant 0 : i32
    %c0_i32_1 = arith.constant 0 : i32
    return %c0_i32, %c0_i32_0 : i32, i32
  }
  func.func @transform_5(%arg0: i32, %arg1: i32) -> (i32, i32) {
    %c0_i32 = arith.constant 0 : i32
    %c0_i32_0 = arith.constant 0 : i32
    %c0_i32_1 = arith.constant 0 : i32
    return %c0_i32, %c0_i32_0 : i32, i32
  }
  func.func @transform_6(%arg0: i32, %arg1: i32) -> (i32, i32, i32) {
    %c0_i32 = arith.constant 0 : i32
    %c0_i32_0 = arith.constant 0 : i32
    return %arg0, %arg1, %c0_i32 : i32, i32, i32
  }
  func.func @transform_7(%arg0: i32, %arg1: i32) -> (i32, i32, i32) {
    %c0_i32 = arith.constant 0 : i32
    %c0_i32_0 = arith.constant 0 : i32
    return %arg0, %arg1, %c0_i32 : i32, i32, i32
  }
}

</mosaic_0001>

<llo_original>
// kernel: tpu_custom_call.1
$region0: #{tpu_custom_call.1}
  #allocation0 [shape = 'u32[]', space=smem, size = 0x4, offset = 0x4, fixed_abs, tag = 'smem constant byte address 0x4 - core index']
  #allocation1 [shape = 'u32[72,128]{1,0:T(1,128)}', space=vmem, size = 0x9000, scoped, tag = 'internal scratch']
  #allocation2 [shape = 'f32[1,32]{1,0:T(1,128)}', space=vmem, size = 0x200, scoped, tag = 'scratch operand']
  %s0 = inlined_call_operand.vmem [shape: f32[8,8], index: 0, kind: input, shape index: {}]
  %s1 = inlined_call_operand.vmem [shape: f32[8,1], index: 1, kind: input, shape index: {}]
  %s2 = inlined_call_operand.hbm [shape: f32[2,8,32], index: 2, kind: input, shape index: {}]
  %s3 = inlined_call_operand.hbm [shape: f32[32,64], index: 3, kind: input, shape index: {}]
  %s4 = inlined_call_operand.hbm [shape: f32[32,64], index: 4, kind: input, shape index: {}]
  %s5 = inlined_call_operand.vmem [shape: f32[1,64], index: 5, kind: input, shape index: {}]
  %s6 = inlined_call_operand.hbm [shape: f32[2,8,32], index: 6, kind: output, shape index: {0}]
  %s7 = inlined_call_operand.hbm [shape: f32[2,8,32], index: 7, kind: output, shape index: {1}]
  %8 = xla_tuple %s6, %s7
  %s9 = sld [smem:[#allocation0]]
  $region81: #{tpu_custom_call.1} parent=0
    _
  %s11 = ssub.s32 1, %s9
  %s12 = scalar_select 0, %s11, %s9
  $region1: #{tpu_custom_call.1} parent=0
    #allocation3 [shape = 'u8[8192]{0}', space=vmem, size = 0x2000, scoped, tag = 'input window, operand 2']
    #allocation4 [shape = 's32[2]{0}', space=sflag, size = 0x8, scoped, tag = 'scoped memory for tpu_custom_call.1']
    #allocation5 [shape = 's32[2]{0}', space=sflag, size = 0x8, scoped, tag = 'scoped memory for tpu_custom_call.1']
    #allocation6 [shape = 'u8[16384]{0}', space=vmem, size = 0x4000, scoped, tag = 'input window, operand 3, single buffered']
    #allocation7 [shape = 's32[1]{0}', space=sflag, size = 0x4, scoped, tag = 'scoped memory for tpu_custom_call.1']
    #allocation8 [shape = 'u8[16384]{0}', space=vmem, size = 0x4000, scoped, tag = 'input window, operand 4, single buffered']
    #allocation9 [shape = 'u8[8192]{0}', space=vmem, size = 0x2000, scoped, tag = 'output window, operand 0']
    #allocation10 [shape = 'u8[8192]{0}', space=vmem, size = 0x2000, scoped, tag = 'output window, operand 1']
    #allocation11 [shape = 's32[2]{0}', space=sflag, size = 0x8, scoped, tag = 'scoped memory for tpu_custom_call.1']
    %13 = vsyncpa [#allocation4], 0
    %s14 = scalar_lea.sflag [#allocation4], 1
    %15 = vsyncpa %s14, 0
    %16 = vsyncpa [#allocation7], 0
    %17 = vsyncpa [#allocation5], 0
    %s18 = scalar_lea.sflag [#allocation5], 1
    %19 = vsyncpa %s18, 0
    %20 = vsyncpa [#allocation11], 0
    %s21 = scalar_lea.sflag [#allocation11], 1
    %22 = vsyncpa %s21, 0
    loop: start=0, step=1, limit=4
    $region2: #{tpu_custom_call.1} parent=1 // loop_pre_header
      _
    $region3: #{tpu_custom_call.1} parent=1 // loop_header
      %s24 = sphi 0, %s28
      %p25 = scmp.ge.s32.totalorder %s24, 4
      %s31 = sphi 0, %s43
      %s32 = sphi 0, %s39
      %s33 = sphi 0, %s31
      %s34 = sphi 0, %s32
      %s35 = sphi 0, %s33
      %s36 = sphi 0, %s34
      %s44 = sphi 0, %s44
      %s46 = sphi 0, %s44
      %s47 = sphi 0, %s46
      %s61 = sphi 0, %s47
      %s67 = sphi 0, %s69
      %s70 = sphi 0, %s67
      %s71 = sphi 0, %s70
      %s87 = sphi 0, %s71
      %s95 = sphi 0, %s97
      %s98 = sphi 0, %s95
      %s99 = sphi 0, %s98
      %s115 = sphi 0, %s99
      %s119 = sphi 0, %s119
      %s121 = sphi 0, %s119
      %s122 = sphi 0, %s121
      %s136 = sphi 0, %s122
      %s140 = sphi 0, %s140
      %s142 = sphi 0, %s140
      %s143 = sphi 0, %s142
      %s157 = sphi 0, %s143
      %s161 = sphi 0, %s161
      %s163 = sphi 0, %s161
      %s164 = sphi 0, %s163
      %s178 = sphi 0, %s164
      %s186 = sphi 0, %s188
      %s189 = sphi 0, %s186
      %s190 = sphi 0, %s189
      %s206 = sphi 0, %s190
      %s214 = sphi 0, %s216
      %s217 = sphi 0, %s214
      %s218 = sphi 0, %s217
      %s234 = sphi 0, %s218
    $region4: #{tpu_custom_call.1} parent=1 // loop_header_branch
      %27 = sbr.rel (%p25) target = $region8
    $region5: #{tpu_custom_call.1} parent=1 // loop_body
      %s29 = ssub.s32 %s24, 1
      %s30 = ssub.s32 %s24, 2
      %s37 = sadd.s32 1, %s32
      %p38 = scmp.ge.s32.totalorder %s37, 1
      %s39 = scalar_select %p38, 0, %s37
      %s40 = sadd.s32 1, %s31
      %s41 = scalar_select %p38, %s40, %s31
      %p42 = scmp.ge.s32.totalorder %s41, 2
      %s43 = scalar_select %p42, 0, %s41
      %s45 = sadd.s32 %s44, 1
      %p48 = scmp.eq.s32.totalorder %s24, 1
      %p49 = scmp.ne.s32.totalorder %s44, %s46
      %p50 = scmp.eq.s32.totalorder %s24, 0
      %p51 = por %p49, %p50
      %p52 = scmp.ne.s32.totalorder %s44, %s46
      %p53 = scmp.eq.s32.totalorder %s29, 1
      %p54 = por %p52, %p53
      %p55 = scmp.ne.s32.totalorder %s46, %s47
      %p56 = scmp.eq.s32.totalorder %s29, 0
      %p57 = por %p55, %p56
      %p58 = scmp.ne.s32.totalorder %s46, %s47
      %p59 = scmp.eq.s32.totalorder %s30, 1
      %p60 = por %p58, %p59
      %p62 = scmp.ne.s32.totalorder %s47, %s61
      %p63 = scmp.eq.s32.totalorder %s30, 0
      %p64 = por %p62, %p63
      %s65 = ssub.s32 %s32, %s39
      %p66 = scmp.eq.s32.totalorder %s65, 0
      %s68 = sadd.s32 %s67, 1
      %s69 = scalar_select %p66, %s67, %s68
      %p72 = pneg %p66
      %p73 = scmp.eq.s32.totalorder %s24, 1
      %p74 = por %p72, %p73
      %p75 = scmp.ne.s32.totalorder %s67, %s70
      %p76 = scmp.eq.s32.totalorder %s24, 0
      %p77 = por %p75, %p76
      %p78 = scmp.ne.s32.totalorder %s67, %s70
      %p79 = scmp.eq.s32.totalorder %s29, 1
      %p80 = por %p78, %p79
      %p81 = scmp.ne.s32.totalorder %s70, %s71
      %p82 = scmp.eq.s32.totalorder %s29, 0
      %p83 = por %p81, %p82
      %p84 = scmp.ne.s32.totalorder %s70, %s71
      %p85 = scmp.eq.s32.totalorder %s30, 1
      %p86 = por %p84, %p85
      %p88 = scmp.ne.s32.totalorder %s71, %s87
      %p89 = scmp.eq.s32.totalorder %s30, 0
      %p90 = por %p88, %p89
      %s91 = ssub.s32 %s31, %s43
      %s92 = ssub.s32 %s32, %s39
      %s93 = sor.u32 %s91, %s92
      %p94 = scmp.eq.s32.totalorder %s93, 0
      %s96 = sadd.s32 %s95, 1
      %s97 = scalar_select %p94, %s95, %s96
      %p100 = pneg %p94
      %p101 = scmp.eq.s32.totalorder %s24, 1
      %p102 = por %p100, %p101
      %p103 = scmp.ne.s32.totalorder %s95, %s98
      %p104 = scmp.eq.s32.totalorder %s24, 0
      %p105 = por %p103, %p104
      %p106 = scmp.ne.s32.totalorder %s95, %s98
      %p107 = scmp.eq.s32.totalorder %s29, 1
      %p108 = por %p106, %p107
      %p109 = scmp.ne.s32.totalorder %s98, %s99
      %p110 = scmp.eq.s32.totalorder %s29, 0
      %p111 = por %p109, %p110
      %p112 = scmp.ne.s32.totalorder %s98, %s99
      %p113 = scmp.eq.s32.totalorder %s30, 1
      %p114 = por %p112, %p113
      %p116 = scmp.ne.s32.totalorder %s99, %s115
      %p117 = scmp.eq.s32.totalorder %s30, 0
      %p118 = por %p116, %p117
      %s120 = sadd.s32 %s119, 1
      %p123 = scmp.eq.s32.totalorder %s24, 1
      %p124 = scmp.ne.s32.totalorder %s119, %s121
      %p125 = scmp.eq.s32.totalorder %s24, 0
      %p126 = por %p124, %p125
      %p127 = scmp.ne.s32.totalorder %s119, %s121
      %p128 = scmp.eq.s32.totalorder %s29, 1
      %p129 = por %p127, %p128
      %p130 = scmp.ne.s32.totalorder %s121, %s122
      %p131 = scmp.eq.s32.totalorder %s29, 0
      %p132 = por %p130, %p131
      %p133 = scmp.ne.s32.totalorder %s121, %s122
      %p134 = scmp.eq.s32.totalorder %s30, 1
      %p135 = por %p133, %p134
      %p137 = scmp.ne.s32.totalorder %s122, %s136
      %p138 = scmp.eq.s32.totalorder %s30, 0
      %p139 = por %p137, %p138
      %s141 = sadd.s32 %s140, 1
      %p144 = scmp.eq.s32.totalorder %s24, 1
      %p145 = scmp.ne.s32.totalorder %s140, %s142
      %p146 = scmp.eq.s32.totalorder %s24, 0
      %p147 = por %p145, %p146
      %p148 = scmp.ne.s32.totalorder %s140, %s142
      %p149 = scmp.eq.s32.totalorder %s29, 1
      %p150 = por %p148, %p149
      %p151 = scmp.ne.s32.totalorder %s142, %s143
      %p152 = scmp.eq.s32.totalorder %s29, 0
      %p153 = por %p151, %p152
      %p154 = scmp.ne.s32.totalorder %s142, %s143
      %p155 = scmp.eq.s32.totalorder %s30, 1
      %p156 = por %p154, %p155
      %p158 = scmp.ne.s32.totalorder %s143, %s157
      %p159 = scmp.eq.s32.totalorder %s30, 0
      %p160 = por %p158, %p159
      %s162 = sadd.s32 %s161, 1
      %p165 = scmp.eq.s32.totalorder %s24, 1
      %p166 = scmp.ne.s32.totalorder %s161, %s163
      %p167 = scmp.eq.s32.totalorder %s24, 0
      %p168 = por %p166, %p167
      %p169 = scmp.ne.s32.totalorder %s161, %s163
      %p170 = scmp.eq.s32.totalorder %s29, 1
      %p171 = por %p169, %p170
      %p172 = scmp.ne.s32.totalorder %s163, %s164
      %p173 = scmp.eq.s32.totalorder %s29, 0
      %p174 = por %p172, %p173
      %p175 = scmp.ne.s32.totalorder %s163, %s164
      %p176 = scmp.eq.s32.totalorder %s30, 1
      %p177 = por %p175, %p176
      %p179 = scmp.ne.s32.totalorder %s164, %s178
      %p180 = scmp.eq.s32.totalorder %s30, 0
      %p181 = por %p179, %p180
      %s182 = ssub.s32 %s31, %s43
      %s183 = ssub.s32 %s32, %s39
      %s184 = sor.u32 %s182, %s183
      %p185 = scmp.eq.s32.totalorder %s184, 0
      %s187 = sadd.s32 %s186, 1
      %s188 = scalar_select %p185, %s186, %s187
      %p191 = pneg %p185
      %p192 = scmp.eq.s32.totalorder %s24, 1
      %p193 = por %p191, %p192
      %p194 = scmp.ne.s32.totalorder %s186, %s189
      %p195 = scmp.eq.s32.totalorder %s24, 0
      %p196 = por %p194, %p195
      %p197 = scmp.ne.s32.totalorder %s186, %s189
      %p198 = scmp.eq.s32.totalorder %s29, 1
      %p199 = por %p197, %p198
      %p200 = scmp.ne.s32.totalorder %s189, %s190
      %p201 = scmp.eq.s32.totalorder %s29, 0
      %p202 = por %p200, %p201
      %p203 = scmp.ne.s32.totalorder %s189, %s190
      %p204 = scmp.eq.s32.totalorder %s30, 1
      %p205 = por %p203, %p204
      %p207 = scmp.ne.s32.totalorder %s190, %s206
      %p208 = scmp.eq.s32.totalorder %s30, 0
      %p209 = por %p207, %p208
      %s210 = ssub.s32 %s31, %s43
      %s211 = ssub.s32 %s32, %s39
      %s212 = sor.u32 %s210, %s211
      %p213 = scmp.eq.s32.totalorder %s212, 0
      %s215 = sadd.s32 %s214, 1
      %s216 = scalar_select %p213, %s214, %s215
      %p219 = pneg %p213
      %p220 = scmp.eq.s32.totalorder %s24, 1
      %p221 = por %p219, %p220
      %p222 = scmp.ne.s32.totalorder %s214, %s217
      %p223 = scmp.eq.s32.totalorder %s24, 0
      %p224 = por %p222, %p223
      %p225 = scmp.ne.s32.totalorder %s214, %s217
      %p226 = scmp.eq.s32.totalorder %s29, 1
      %p227 = por %p225, %p226
      %p228 = scmp.ne.s32.totalorder %s217, %s218
      %p229 = scmp.eq.s32.totalorder %s29, 0
      %p230 = por %p228, %p229
      %p231 = scmp.ne.s32.totalorder %s217, %s218
      %p232 = scmp.eq.s32.totalorder %s30, 1
      %p233 = por %p231, %p232
      %p235 = scmp.ne.s32.totalorder %s218, %s234
      %p236 = scmp.eq.s32.totalorder %s30, 0
      %p237 = por %p235, %p236
      %p238 = scmp.le.s32.totalorder 1, %s24
      %p239 = scmp.lt.s32.totalorder %s24, 3
      %p240 = pnand %p238, %p239
      %p241 = pneg %p240
      // Predicated region
      $region9: #{tpu_custom_call.1} parent=5 // pred_check
        _
      $region10: #{tpu_custom_call.1} parent=5 // pred_check_branch
        %243 = sbr.rel (%p240) target = $region12
      $region11: #{tpu_custom_call.1} parent=5 // pred_region
        %s244 = ssub.s32 %s24, 1
        // Predicated region
        $region13: #{tpu_custom_call.1} parent=11 // pred_check
          %p245 = pneg %p57
        $region14: #{tpu_custom_call.1} parent=11 // pred_check_branch
          %247 = sbr.rel (%p245) target = $region16
        $region15: #{tpu_custom_call.1} parent=11 // pred_region
          _
        $region16: #{tpu_custom_call.1} parent=11 // pred_fallthru
          _
        // Predicated region
        $region17: #{tpu_custom_call.1} parent=11 // pred_check
          %p248 = pneg %p83
        $region18: #{tpu_custom_call.1} parent=11 // pred_check_branch
          %250 = sbr.rel (%p248) target = $region20
        $region19: #{tpu_custom_call.1} parent=11 // pred_region
          %p251 = scmp.lt.s32.totalorder %s34, 0
          %s252 = scalar_select %p251, %s34, 0
          %s253 = smul.addr %s252, 8
          %s254 = scalar_lea.vmem %s1, %s253
        $region20: #{tpu_custom_call.1} parent=11 // pred_fallthru
          _
        // Predicated region
        $region21: #{tpu_custom_call.1} parent=11 // pred_check
          %p255 = pneg %p132
        $region22: #{tpu_custom_call.1} parent=11 // pred_check_branch
          %257 = sbr.rel (%p255) target = $region24
        $region23: #{tpu_custom_call.1} parent=11 // pred_region
          %259 = vsyncadd [#allocation7], 0
          %s260 = sshll.u32 %s3, 4
          %s261 = int_to_ptr.hbm [resolvable:$true] %s260
          %s262 = sshll.u32 [#allocation6], 4
          %s263 = int_to_ptr.vmem [resolvable:$true] %s262
          %268 = dma.hbm_to_vmem [thread:$0]  %s261, 512, %s263, [#allocation7], 128, 128, 8
        $region24: #{tpu_custom_call.1} parent=11 // pred_fallthru
          _
        // Predicated region
        $region25: #{tpu_custom_call.1} parent=11 // pred_check
          %p269 = pneg %p153
        $region26: #{tpu_custom_call.1} parent=11 // pred_check_branch
          %271 = sbr.rel (%p269) target = $region28
        $region27: #{tpu_custom_call.1} parent=11 // pred_region
          %273 = vsyncadd [#allocation7], 0
          %s274 = sshll.u32 %s4, 4
          %s275 = int_to_ptr.hbm [resolvable:$true] %s274
          %s276 = sshll.u32 [#allocation8], 4
          %s277 = int_to_ptr.vmem [resolvable:$true] %s276
          %282 = dma.hbm_to_vmem [thread:$0]  %s275, 512, %s277, [#allocation7], 128, 128, 8
        $region28: #{tpu_custom_call.1} parent=11 // pred_fallthru
          _
        // Predicated region
        $region29: #{tpu_custom_call.1} parent=11 // pred_check
          %p283 = pneg %p174
        $region30: #{tpu_custom_call.1} parent=11 // pred_check_branch
          %285 = sbr.rel (%p283) target = $region32
        $region31: #{tpu_custom_call.1} parent=11 // pred_region
          _
        $region32: #{tpu_custom_call.1} parent=11 // pred_fallthru
          _
      $region12: #{tpu_custom_call.1} parent=5 // pred_fallthru
        _
      %p286 = scmp.lt.s32.totalorder %s24, 2
      // Predicated region
      $region33: #{tpu_custom_call.1} parent=5 // pred_check
        %p287 = pneg %p286
      $region34: #{tpu_custom_call.1} parent=5 // pred_check_branch
        %289 = sbr.rel (%p287) target = $region36
      $region35: #{tpu_custom_call.1} parent=5 // pred_region
        // Predicated region
        $region37: #{tpu_custom_call.1} parent=35 // pred_check
          %p290 = pneg %p105
        $region38: #{tpu_custom_call.1} parent=35 // pred_check_branch
          %292 = sbr.rel (%p290) target = $region40
        $region39: #{tpu_custom_call.1} parent=35 // pred_region
          %s293 = sand.u32 %s95, 1
          %s294 = scalar_lea.sflag [#allocation4], %s293
          %s295 = sand.u32 %s95, 1
          %s296 = smul.addr %s295, 8
          %s297 = scalar_lea.vmem [#allocation3], %s296
          %299 = vsyncadd %s294, 0
          %s300 = sadd.s32 %s32, %s31
          %s301 = smul.addr %s300, 8
          %s302 = scalar_lea.hbm %s2, %s301
          %s304 = sshll.u32 %s302, 4
          %s305 = int_to_ptr.hbm [resolvable:$true] %s304
          %s306 = sshll.u32 %s297, 4
          %s307 = int_to_ptr.vmem [resolvable:$true] %s306
          %309 = dma.hbm_to_vmem [thread:$0]  %s305, 128, %s307, %s294
        $region40: #{tpu_custom_call.1} parent=35 // pred_fallthru
          _
      $region36: #{tpu_custom_call.1} parent=5 // pred_fallthru
        _
      %p310 = scmp.le.s32.totalorder 1, %s24
      %p311 = scmp.lt.s32.totalorder %s24, 3
      %p312 = pnand %p310, %p311
      %p313 = pneg %p312
      // Predicated region
      $region41: #{tpu_custom_call.1} parent=5 // pred_check
        _
      $region42: #{tpu_custom_call.1} parent=5 // pred_check_branch
        %315 = sbr.rel (%p312) target = $region44
      $region43: #{tpu_custom_call.1} parent=5 // pred_region
        %s316 = ssub.s32 %s24, 1
        %s317 = sand.u32 %s98, 1
        %s318 = scalar_lea.sflag [#allocation4], %s317
        %s319 = sand.u32 %s98, 1
        %s320 = smul.addr %s319, 8
        %s321 = scalar_lea.vmem [#allocation3], %s320
        // Predicated region
        $region45: #{tpu_custom_call.1} parent=43 // pred_check
          %p322 = pneg %p111
        $region46: #{tpu_custom_call.1} parent=43 // pred_check_branch
          %324 = sbr.rel (%p322) target = $region48
        $region47: #{tpu_custom_call.1} parent=43 // pred_region
          %326 = dma.done %s318, 128
        $region48: #{tpu_custom_call.1} parent=43 // pred_fallthru
          _
        // Predicated region
        $region49: #{tpu_custom_call.1} parent=43 // pred_check
          %p327 = pneg %p132
        $region50: #{tpu_custom_call.1} parent=43 // pred_check_branch
          %329 = sbr.rel (%p327) target = $region52
        $region51: #{tpu_custom_call.1} parent=43 // pred_region
          %331 = dma.done [#allocation7], 512
        $region52: #{tpu_custom_call.1} parent=43 // pred_fallthru
          _
        // Predicated region
        $region53: #{tpu_custom_call.1} parent=43 // pred_check
          %p332 = pneg %p153
        $region54: #{tpu_custom_call.1} parent=43 // pred_check_branch
          %334 = sbr.rel (%p332) target = $region56
        $region55: #{tpu_custom_call.1} parent=43 // pred_region
          %336 = dma.done [#allocation7], 512
        $region56: #{tpu_custom_call.1} parent=43 // pred_fallthru
          _
        %p337 = pneg %p57
        %p338 = pneg %p54
        %p339 = scmp.lt.s32.totalorder %s34, 0
        %s340 = scalar_select %p339, %s34, 0
        %s341 = smul.addr %s340, 8
        %s342 = scalar_lea.vmem %s1, %s341
        %p343 = pneg %p83
        %p344 = pneg %p80
        %s345 = sand.u32 %s98, 1
        %s346 = scalar_lea.sflag [#allocation4], %s345
        %s347 = sand.u32 %s98, 1
        %s348 = smul.addr %s347, 8
        %s349 = scalar_lea.vmem [#allocation3], %s348
        %p350 = pneg %p111
        %p351 = pneg %p108
        %p352 = pneg %p132
        %p353 = pneg %p129
        %p354 = pneg %p153
        %p355 = pneg %p150
        %p356 = pneg %p174
        %p357 = pneg %p171
        %p358 = pneg %p202
        %p359 = pneg %p199
        %s360 = sand.u32 %s189, 1
        %s361 = scalar_lea.sflag [#allocation5], %s360
        %s362 = sand.u32 %s189, 1
        %s363 = smul.addr %s362, 8
        %s364 = scalar_lea.vmem [#allocation9], %s363
        %p365 = pneg %p230
        %p366 = pneg %p227
        %s367 = sand.u32 %s217, 1
        %s368 = scalar_lea.sflag [#allocation11], %s367
        %s369 = sand.u32 %s217, 1
        %s370 = smul.addr %s369, 8
        %s371 = scalar_lea.vmem [#allocation10], %s370
        %p372 = scmp.lt.s32.totalorder %s34, 0
        %s373 = scalar_select %p372, %s34, 0
        %s374 = smul.addr %s373, 8
        %s375 = scalar_lea.vmem %s1, %s374
        %p376 = scmp.eq.s32.totalorder %s34, 0
        // Predicated region
        $region57: #{tpu_custom_call.1} parent=43 // pred_check
          %p377 = pneg %p376
        $region58: #{tpu_custom_call.1} parent=43 // pred_check_branch
          %379 = sbr.rel (%p377) target = $region60
        $region59: #{tpu_custom_call.1} parent=43 // pred_region
          %vm380 = vcmask 253952
          %381 = vst.msk [vmem:[#allocation2] sm:$0x1] %vm380, 0.0
        $region60: #{tpu_custom_call.1} parent=43 // pred_fallthru
          _
        %v382 = vld [vmem:[%s321] sm:$0xff]
        %v383 = vld [vmem:[%s0] sm:$0xff]
        %v384 = vld [vmem:[#allocation2] sm:$0x1]
        %v386 = vperm.slane %v384, 0
        %vm388 = vcmask 64512
        %v390 = vsel %vm388, %v383, 0
        %392 = vmatpush.msra.mxu0 0.0
        %393 = vmatpush.msra.mxu0 0.0
        %394 = vmatpush.msra.mxu0 0.0
        %395 = vmatpush.msra.mxu0 0.0
        %396 = vmatpush.msra.mxu0 0.0
        %397 = vmatpush.msra.mxu0 0.0
        %398 = vmatpush.msra.mxu0 0.0
        %399 = vmatpush.msra.mxu0 0.0
        %400 = vmatpush.msra.mxu0 0.0
        %401 = vmatpush.msra.mxu0 0.0
        %402 = vmatpush.msra.mxu0 0.0
        %403 = vmatpush.msra.mxu0 0.0
        %404 = vmatpush.msra.mxu0 0.0
        %405 = vmatpush.msra.mxu0 0.0
        %406 = vmatpush.msra.mxu0 0.0
        %407 = vmatpush.msra.mxu0 %v382
        %408 = vmatmul.f32.gmra.mxu0 %v390
        %v409 = vpop.f32.mrf.mxu0
        %v410 = vadd.f32 %v386, %v409
        %411 = vdwg.mxu0
        %v412 = vld [vmem:[%s375] sm:$0xff]
        %414 = vset.pattern.permute.xlu0 0
        %415 = vperm.xlu0 %414, %v412
        %v416 = vpop.permute.xlu0 %415
        %v418 = vmul.f32 %v410, %v416
        %vm419 = vcmask 261127
        %420 = vst.msk [vmem:[#allocation2 - $0x7] sm:$0x80] %vm419, %v410
        %v421 = vld [vmem:[#allocation6] sm:$0xff]
        %v422 = vld [vmem:[#allocation6 + $0x8] sm:$0xff]
        %v423 = vld [vmem:[#allocation6 + $0x10] sm:$0xff]
        %v424 = vld [vmem:[#allocation6 + $0x18] sm:$0xff]
        %v425 = vld [vmem:[#allocation8] sm:$0xff]
        %v426 = vld [vmem:[#allocation8 + $0x8] sm:$0xff]
        %v427 = vld [vmem:[#allocation8 + $0x10] sm:$0xff]
        %v428 = vld [vmem:[#allocation8 + $0x18] sm:$0xff]
        %vm429 = vcmask 261120
        %v431 = vsel %vm429, %v418, 0
        %433 = vmatpush.msra.mxu0 0.0
        %434 = vmatpush.msra.mxu0 0.0
        %435 = vmatpush.msra.mxu0 0.0
        %436 = vmatpush.msra.mxu0 0.0
        %437 = vmatpush.msra.mxu0 0.0
        %438 = vmatpush.msra.mxu0 0.0
        %439 = vmatpush.msra.mxu0 0.0
        %440 = vmatpush.msra.mxu0 0.0
        %441 = vmatpush.msra.mxu0 0.0
        %442 = vmatpush.msra.mxu0 0.0
        %443 = vmatpush.msra.mxu0 0.0
        %444 = vmatpush.msra.mxu0 0.0
        %445 = vmatpush.msra.mxu0 %v428
        %446 = vmatpush.msra.mxu0 %v427
        %447 = vmatpush.msra.mxu0 %v426
        %448 = vmatpush.msra.mxu0 %v425
        %449 = vmatmul.f32.gmra.mxu0 %v431
        %v450 = vpop.f32.mrf.mxu0
        %v451 = vadd.f32 0.0, %v450
        %452 = vdwg.mxu0
        %v454 = vsel %vm429, %v382, 0
        %456 = vmatpush.msra.mxu0 0.0
        %457 = vmatpush.msra.mxu0 0.0
        %458 = vmatpush.msra.mxu0 0.0
        %459 = vmatpush.msra.mxu0 0.0
        %460 = vmatpush.msra.mxu0 0.0
        %461 = vmatpush.msra.mxu0 0.0
        %462 = vmatpush.msra.mxu0 0.0
        %463 = vmatpush.msra.mxu0 0.0
        %464 = vmatpush.msra.mxu0 0.0
        %465 = vmatpush.msra.mxu0 0.0
        %466 = vmatpush.msra.mxu0 0.0
        %467 = vmatpush.msra.mxu0 0.0
        %468 = vmatpush.msra.mxu0 %v424
        %469 = vmatpush.msra.mxu0 %v423
        %470 = vmatpush.msra.mxu0 %v422
        %471 = vmatpush.msra.mxu0 %v421
        %472 = vmatmul.f32.gmra.mxu0 %v454
        %v473 = vpop.f32.mrf.mxu0
        %v474 = vadd.f32 %v451, %v473
        %475 = vdwg.mxu0
        %v476 = vld [vmem:[%s5] sm:$0x1]
        %v478 = vperm.slane %v476, 0
        %v480 = vadd.f32 %v474, %v478
        %v481 = vxor.u32 %v480, 2147483648
        %v482 = vmul.f32 %v481, 1.442695
        %v483 = vpow.pop %v482
        %v484 = vadd.f32 %v483, 1.0
        %v485 = vrcp.pop %v484
        %v486 = vmul.f32 %v484, %v485
        %v487 = vsub.f32 1.0, %v486
        %v488 = vmul.f32 %v485, %v487
        %v489 = vadd.f32 %v485, %v488
        %vm490 = vweird.f32 %v484
        %vm491 = vweird.f32 %v485
        %vm492 = vmor %vm490, %vm491
        %v493 = vsel %vm492, %v485, %v489
        %v494 = vand.u32 2147483647, %v484
        %vm495 = vcmp.eq.f32.partialorder %v494, 8.507059e+37
        %v496 = vand.u32 %v484, 2147483648
        %v497 = vor.u32 1.1754944e-38, %v496
        %v498 = vsel %vm495, %v497, %v493
        %v499 = vmul.f32 1.0, %v498
        %v500 = vmul.f32 %v499, %v382
        %501 = vrot.lane.b32.xlu0 %v418, 32
        %v502 = vpop.permute.xlu0 %501
        %v504 = vmul.f32 %v499, %v502
        %506 = vrot.lane.b32.xlu0 %v504, 96
        %v507 = vpop.permute.xlu0 %506
        %v509 = vadd.f32 %v500, %v507
        %510 = vst.msk [vmem:[%s364] sm:$0xff] %vm429, %v509
        %511 = vst.msk [vmem:[%s371] sm:$0xff] %vm429, %v418
        %s512 = sand.u32 %s189, 1
        %s513 = scalar_lea.sflag [#allocation5], %s512
        %s514 = sand.u32 %s189, 1
        %s515 = smul.addr %s514, 8
        %s516 = scalar_lea.vmem [#allocation9], %s515
        %s517 = sand.u32 %s217, 1
        %s518 = scalar_lea.sflag [#allocation11], %s517
        %s519 = sand.u32 %s217, 1
        %s520 = smul.addr %s519, 8
        %s521 = scalar_lea.vmem [#allocation10], %s520
        // Predicated region
        $region61: #{tpu_custom_call.1} parent=43 // pred_check
          %p522 = pneg %p199
        $region62: #{tpu_custom_call.1} parent=43 // pred_check_branch
          %524 = sbr.rel (%p522) target = $region64
        $region63: #{tpu_custom_call.1} parent=43 // pred_region
          %526 = vsyncadd %s513, 0
          %s527 = sadd.s32 %s34, %s33
          %s528 = smul.addr %s527, 8
          %s529 = scalar_lea.hbm %s6, %s528
          %s531 = sshll.u32 %s516, 4
          %s532 = int_to_ptr.vmem [resolvable:$true] %s531
          %s533 = sshll.u32 %s529, 4
          %s534 = int_to_ptr.hbm [resolvable:$true] %s533
          %536 = dma.vmem_to_hbm [thread:$0]  %s532, 128, %s534, %s513
        $region64: #{tpu_custom_call.1} parent=43 // pred_fallthru
          _
        // Predicated region
        $region65: #{tpu_custom_call.1} parent=43 // pred_check
          %p537 = pneg %p227
        $region66: #{tpu_custom_call.1} parent=43 // pred_check_branch
          %539 = sbr.rel (%p537) target = $region68
        $region67: #{tpu_custom_call.1} parent=43 // pred_region
          %541 = vsyncadd %s518, 0
          %s542 = sadd.s32 %s34, %s33
          %s543 = smul.addr %s542, 8
          %s544 = scalar_lea.hbm %s7, %s543
          %s546 = sshll.u32 %s521, 4
          %s547 = int_to_ptr.vmem [resolvable:$true] %s546
          %s548 = sshll.u32 %s544, 4
          %s549 = int_to_ptr.hbm [resolvable:$true] %s548
          %551 = dma.vmem_to_hbm [thread:$0]  %s547, 128, %s549, %s518
        $region68: #{tpu_custom_call.1} parent=43 // pred_fallthru
          _
      $region44: #{tpu_custom_call.1} parent=5 // pred_fallthru
        _
      %p552 = scmp.le.s32.totalorder 2, %s24
      // Predicated region
      $region69: #{tpu_custom_call.1} parent=5 // pred_check
        %p553 = pneg %p552
      $region70: #{tpu_custom_call.1} parent=5 // pred_check_branch
        %555 = sbr.rel (%p553) target = $region72
      $region71: #{tpu_custom_call.1} parent=5 // pred_region
        %s556 = ssub.s32 %s24, 2
        // Predicated region
        $region73: #{tpu_custom_call.1} parent=71 // pred_check
          %p557 = pneg %p205
        $region74: #{tpu_custom_call.1} parent=71 // pred_check_branch
          %559 = sbr.rel (%p557) target = $region76
        $region75: #{tpu_custom_call.1} parent=71 // pred_region
          %s560 = sand.u32 %s190, 1
          %s561 = scalar_lea.sflag [#allocation5], %s560
          %s562 = sand.u32 %s190, 1
          %s563 = smul.addr %s562, 8
          %s564 = scalar_lea.vmem [#allocation9], %s563
          %566 = dma.done %s561, 128
        $region76: #{tpu_custom_call.1} parent=71 // pred_fallthru
          _
        // Predicated region
        $region77: #{tpu_custom_call.1} parent=71 // pred_check
          %p567 = pneg %p233
        $region78: #{tpu_custom_call.1} parent=71 // pred_check_branch
          %569 = sbr.rel (%p567) target = $region80
        $region79: #{tpu_custom_call.1} parent=71 // pred_region
          %s570 = sand.u32 %s218, 1
          %s571 = scalar_lea.sflag [#allocation11], %s570
          %s572 = sand.u32 %s218, 1
          %s573 = smul.addr %s572, 8
          %s574 = scalar_lea.vmem [#allocation10], %s573
          %576 = dma.done %s571, 128
        $region80: #{tpu_custom_call.1} parent=71 // pred_fallthru
          _
      $region72: #{tpu_custom_call.1} parent=5 // pred_fallthru
        _
    $region6: #{tpu_custom_call.1} parent=1 // loop_footer
      %s28 = sadd.s32 1, %s24
    $region7: #{tpu_custom_call.1} parent=1 // loop_footer_branch
      %23 = sbr.rel target = $region3
    $region8: #{tpu_custom_call.1} parent=1 // loop_exit
      _
    %577 = vsyncpa [#allocation4], 1
    %s578 = scalar_lea.sflag [#allocation4], 1
    %579 = vsyncpa %s578, 1
    %580 = vsyncpa [#allocation7], 1
    %581 = vsyncpa [#allocation5], 1
    %s582 = scalar_lea.sflag [#allocation5], 1
    %583 = vsyncpa %s582, 1
    %584 = vsyncpa [#allocation11], 1
    %s585 = scalar_lea.sflag [#allocation11], 1
    %586 = vsyncpa %s585, 1

</llo_original>
